<compile_context>
chip_gen: v6e
topology: v6e:2x2x1
jax: 0.10.0
libtpu: 0.0.40
codegen_flags: <defaults>
</compile_context>

<pallas_src>
import functools

import jax
import jax.numpy as jnp
from jax.experimental import pallas as pl
from jax.experimental.pallas import tpu as pltpu


def ltr_policy_kernel(x_ref, w_ref, b_ref, out_ref, *, n_chunks, chunk):
    # Packed weights (bf16): [w1_pad(+b1 row), w2, [wah|wrh], blockdiag(wam,wrp)]
    w0 = w_ref[0]
    w1 = w_ref[1]
    w2 = w_ref[2]
    w3 = w_ref[3]
    # Packed bias / mask rows (f32, (1,128) each)
    b2 = b_ref[0:1, :]
    bbr = b_ref[1:2, :]
    bhd = b_ref[2:3, :]
    mask_add = b_ref[3:4, :]   # 0.0 on logit cols, -1e30 elsewhere
    sel = b_ref[4:5, :]        # 1.0 on logit cols, 0.0 elsewhere

    # Independent row chunks -> ILP across the two 4-stage dependency chains.
    for c in range(n_chunks):
        r0 = c * chunk

        x = x_ref[r0:r0 + chunk, :]                               # bf16 (chunk,128)

        # affine_layers + relu. b1 is folded into w0 via the 1.0 lane in x.
        h = jnp.dot(x, w0, preferred_element_type=jnp.float32)
        h = jnp.maximum(h, 0.0)
        h = jnp.dot(h.astype(jnp.bfloat16), w1,
                    preferred_element_type=jnp.float32) + b2
        h = jnp.maximum(h, 0.0)

        # fused action/repeat hidden branches: [ax | rx] in one (chunk,128) tile
        br = jnp.dot(h.astype(jnp.bfloat16), w2,
                     preferred_element_type=jnp.float32) + bbr
        br = jnp.maximum(br, 0.0)

        # fused heads via block-diagonal weight:
        #   cols [0, AD)        -> action_mean
        #   cols [AD, AD+LT)    -> repeat logits
        #   remaining cols      -> exact zeros (zero weight/bias pad)
        head = jnp.dot(br.astype(jnp.bfloat16), w3,
                       preferred_element_type=jnp.float32) + bhd

        # masked softmax over only the logit columns (lane-dense, no iota)
        masked = head + mask_add
        m = jnp.max(masked, axis=-1, keepdims=True)
        e = jnp.exp(masked - m)                                   # 0 outside logits
        denom = jnp.sum(e, axis=-1, keepdims=True)
        prob = e * pl.reciprocal(denom, approx=True)

        # single lane-dense store per chunk: [mean | prob | zeros]
        out_ref[r0:r0 + chunk, :] = head * (1.0 - sel) + prob * sel


def pack_params(params):
    """One-time packing of the 13 small parameter tensors.

    Returns (W, Bs, action_dim, ltr_n, state_dim); W is bf16 (4,128,128),
    Bs is f32 (5,128).  Call this once (at init / after a param update), NOT
    on the per-forward hot path.
    """
    w1 = params["w1"]                      # (state_dim, 128)
    state_dim = w1.shape[0]
    H = params["w2"].shape[1]              # 128
    half = params["wah"].shape[1]          # 64
    AD = params["wam"].shape[1]
    LT = params["wrp"].shape[1]
    assert H == 128 and 2 * half == H and state_dim < 128 and AD + LT <= 128

    # Stage-0 weight with b1 folded into row `state_dim` (input lane carries 1.0).
    w1p = jnp.zeros((128, H), jnp.float32)
    w1p = w1p.at[:state_dim, :].set(w1)
    w1p = w1p.at[state_dim, :].set(params["b1"][0])
    wbr = jnp.concatenate([params["wah"], params["wrh"]], axis=1)     # (128, 128)
    whd = jnp.zeros((H, 128), jnp.float32)
    whd = whd.at[:half, :AD].set(params["wam"])
    whd = whd.at[half:, AD:AD + LT].set(params["wrp"])
    W = jnp.stack([w1p, params["w2"], wbr, whd], axis=0).astype(jnp.bfloat16)

    bbr = jnp.concatenate([params["bah"][0], params["brh"][0]])       # (128,)
    bhd = jnp.zeros((128,), jnp.float32)
    bhd = bhd.at[:AD].set(params["bam"][0]).at[AD:AD + LT].set(params["brp"][0])
    col = jnp.arange(128)
    is_logit = (col >= AD) & (col < AD + LT)
    mask_add = jnp.where(is_logit, 0.0, -1e30).astype(jnp.float32)
    sel = is_logit.astype(jnp.float32)
    Bs = jnp.stack([params["b2"][0], bbr, bhd, mask_add, sel], axis=0)  # (5,128)
    return W, Bs, AD, LT, state_dim


def _choose_tiling(B):
    """Bucketed padded-batch / tile sizes to bound the number of compilations."""
    B8 = -(-B // 8) * 8
    B_pad = None
    for b in (8, 64, 256, 1024):
        if B8 <= b:
            B_pad = b
            break
    if B_pad is None:
        B_pad = -(-B8 // 1024) * 1024
    if B_pad >= 2048:
        TB = 1024                      # big tiles, grid >= 2
    elif B_pad >= 16:
        TB = B_pad // 2                # always >= 2 grid steps -> both v7x TCs
    else:
        TB = B_pad                     # tiny batch: single 8-row tile
    return B_pad, TB


def ltr_policy_forward(x, W, Bs, log_std, *, action_dim, ltr_n, state_dim):
    B = x.shape[0]
    B_pad, TB = _choose_tiling(B)
    n_chunks = 2 if TB >= 512 else 1
    chunk = TB // n_chunks

    # Lane-pad to 128 (bf16) with a constant 1.0 in lane `state_dim` (b1 fold).
    x_pad = jnp.zeros((B_pad, 128), jnp.bfloat16)
    x_pad = x_pad.at[:B, :state_dim].set(x.astype(jnp.bfloat16))
    x_pad = x_pad.at[:, state_dim].set(1.0)

    kernel = functools.partial(ltr_policy_kernel, n_chunks=n_chunks, chunk=chunk)

    cost = pl.CostEstimate(
        flops=int(2 * B_pad * 128 * 128 * 4),
        transcendentals=int(B_pad * 128),
        bytes_accessed=int(x_pad.size * 2 + W.size * 2 + Bs.size * 4
                           + B_pad * 128 * 4),
    )

    slab = pl.pallas_call(
        kernel,
        out_shape=jax.ShapeDtypeStruct((B_pad, 128), jnp.float32),
        grid=(B_pad // TB,),
        in_specs=[
            pl.BlockSpec((TB, 128), lambda i: (i, 0)),          # x tile (bf16)
            pl.BlockSpec((4, 128, 128), lambda i: (0, 0, 0)),   # packed weights
            pl.BlockSpec((5, 128), lambda i: (0, 0)),           # biases + mask rows
        ],
        out_specs=pl.BlockSpec((TB, 128), lambda i: (i, 0)),
        compiler_params=pltpu.CompilerParams(
            dimension_semantics=("parallel",)),
        cost_estimate=cost,
    )(x_pad, W, Bs)

    action_mean = slab[:B, :action_dim]
    repeat_prob = slab[:B, action_dim:action_dim + ltr_n]
    # log_std / std are input-independent -> computed outside the kernel.
    action_log_std = jnp.broadcast_to(log_std, (B, action_dim))
    action_std = jnp.exp(action_log_std)
    return action_mean, action_log_std, action_std, repeat_prob


def init_params(key, state_dim, action_dim, hidden_size=(128, 128), log_std=0.0, ltr_n=1):
    """Deterministic synthetic init (stand-in for set_init)."""
    def linear(k, fan_in, fan_out, scale=0.1):
        kw, kb = jax.random.split(k)
        w = scale * jax.random.normal(kw, (fan_in, fan_out), jnp.float32)
        b = scale * jax.random.normal(kb, (1, fan_out), jnp.float32)
        return w, b

    keys = jax.random.split(key, 6)
    h0, h1 = hidden_size
    half = h1 // 2
    w1, b1 = linear(keys[0], state_dim, h0)
    w2, b2 = linear(keys[1], h0, h1)
    wah, bah = linear(keys[2], h1, half)
    wrh, brh = linear(keys[3], h1, half)
    wam, bam = linear(keys[4], half, action_dim)
    wrp, brp = linear(keys[5], half, ltr_n)
    return {
        "w1": w1, "b1": b1, "w2": w2, "b2": b2,
        "wah": wah, "bah": bah, "wrh": wrh, "brh": brh,
        "wam": wam, "bam": bam, "wrp": wrp, "brp": brp,
        "log_std": jnp.full((1, action_dim), log_std, jnp.float32),
    }


def reference_forward(x, p):
    """Pure-JAX f32 reference mirroring the PyTorch module."""
    h = jnp.maximum(x @ p["w1"] + p["b1"], 0.0)
    h = jnp.maximum(h @ p["w2"] + p["b2"], 0.0)
    ax = jnp.maximum(h @ p["wah"] + p["bah"], 0.0)
    rx = jnp.maximum(h @ p["wrh"] + p["brh"], 0.0)
    mean = ax @ p["wam"] + p["bam"]
    log_std = jnp.broadcast_to(p["log_std"], mean.shape)
    std = jnp.exp(log_std)
    logits = rx @ p["wrp"] + p["brp"]
    prob = jax.nn.softmax(logits, axis=1)
    return mean, log_std, std, prob


if __name__ == "__main__":
    B, state_dim, action_dim, ltr_n = 8, 16, 8, 4
    hidden_size = (128, 128)

    key = jax.random.PRNGKey(0)
    kx, kp = jax.random.split(key)
    x = jax.random.normal(kx, (B, state_dim), jnp.float32)
    params = init_params(kp, state_dim, action_dim, hidden_size, log_std=0.0, ltr_n=ltr_n)

    # Pack once (hoisted off the per-call hot path).
    W, Bs, AD, LT, SD = pack_params(params)

    forward = jax.jit(functools.partial(
        ltr_policy_forward, action_dim=AD, ltr_n=LT, state_dim=SD))

    outs = forward(x, W, Bs, params["log_std"])
    outs = jax.block_until_ready(outs)

    refs = reference_forward(x, params)
    names = ("mean", "log_std", "std", "prob")
    # Tolerances relaxed for bf16 matmuls (f32 accumulation) + approx reciprocal.
    tols = {"mean": (2e-2, 2e-2), "log_std": (1e-6, 1e-6),
            "std": (1e-6, 1e-6), "prob": (2e-2, 2e-2)}
    for name, o, r in zip(names, outs, refs):
        assert o.shape == r.shape and o.dtype == r.dtype, name
        rtol, atol = tols[name]
        assert jnp.allclose(o, r, rtol=rtol, atol=atol), name

    print("KERNEL_OK")
</pallas_src>

<mosaic_0001>
module attributes {stable_mosaic.version = 11 : i64} {
  func.func @ltr_policy_kernel(%arg0: i32, %arg1: memref<8x128xbf16, #tpu.memory_space<vmem>>, %arg2: memref<4x128x128xbf16, #tpu.memory_space<vmem>>, %arg3: memref<5x128xf32, #tpu.memory_space<vmem>>, %arg4: memref<8x128xf32, #tpu.memory_space<vmem>>) attributes {dimension_semantics = [#tpu.dimension_semantics<parallel>], iteration_bounds = array<i64: 1>, scalar_prefetch = 0 : i64, scratch_operands = 0 : i64, tpu.core_type = #tpu.core_type<tc>, window_params = [{transform_indices = @transform_0, window_bounds = array<i64: 8, 128>}, {pipeline_mode = #tpu.pipeline_mode<synchronous>, transform_indices = @transform_1, window_bounds = array<i64: 4, 128, 128>}, {pipeline_mode = #tpu.pipeline_mode<synchronous>, transform_indices = @transform_2, window_bounds = array<i64: 5, 128>}, {transform_indices = @transform_3, window_bounds = array<i64: 8, 128>}]} {
    %c0 = arith.constant 0 : index
    %c0_0 = arith.constant 0 : index
    %c0_1 = arith.constant 0 : index
    %0 = vector.load %arg2[%c0, %c0_0, %c0_1] : memref<4x128x128xbf16, #tpu.memory_space<vmem>>, vector<1x128x128xbf16>
    %1 = vector.shape_cast %0 : vector<1x128x128xbf16> to vector<128x128xbf16>
    %c1 = arith.constant 1 : index
    %c0_2 = arith.constant 0 : index
    %c0_3 = arith.constant 0 : index
    %2 = vector.load %arg2[%c1, %c0_2, %c0_3] : memref<4x128x128xbf16, #tpu.memory_space<vmem>>, vector<1x128x128xbf16>
    %3 = vector.shape_cast %2 : vector<1x128x128xbf16> to vector<128x128xbf16>
    %c2 = arith.constant 2 : index
    %c0_4 = arith.constant 0 : index
    %c0_5 = arith.constant 0 : index
    %4 = vector.load %arg2[%c2, %c0_4, %c0_5] : memref<4x128x128xbf16, #tpu.memory_space<vmem>>, vector<1x128x128xbf16>
    %5 = vector.shape_cast %4 : vector<1x128x128xbf16> to vector<128x128xbf16>
    %c3 = arith.constant 3 : index
    %c0_6 = arith.constant 0 : index
    %c0_7 = arith.constant 0 : index
    %6 = vector.load %arg2[%c3, %c0_6, %c0_7] : memref<4x128x128xbf16, #tpu.memory_space<vmem>>, vector<1x128x128xbf16>
    %7 = vector.shape_cast %6 : vector<1x128x128xbf16> to vector<128x128xbf16>
    %c0_8 = arith.constant 0 : index
    %c0_9 = arith.constant 0 : index
    %8 = vector.load %arg3[%c0_8, %c0_9] : memref<5x128xf32, #tpu.memory_space<vmem>>, vector<1x128xf32>
    %c1_10 = arith.constant 1 : index
    %c0_11 = arith.constant 0 : index
    %9 = vector.load %arg3[%c1_10, %c0_11] : memref<5x128xf32, #tpu.memory_space<vmem>>, vector<1x128xf32>
    %c2_12 = arith.constant 2 : index
    %c0_13 = arith.constant 0 : index
    %10 = vector.load %arg3[%c2_12, %c0_13] : memref<5x128xf32, #tpu.memory_space<vmem>>, vector<1x128xf32>
    %c3_14 = arith.constant 3 : index
    %c0_15 = arith.constant 0 : index
    %11 = vector.load %arg3[%c3_14, %c0_15] : memref<5x128xf32, #tpu.memory_space<vmem>>, vector<1x128xf32>
    %c4 = arith.constant 4 : index
    %c0_16 = arith.constant 0 : index
    %12 = vector.load %arg3[%c4, %c0_16] : memref<5x128xf32, #tpu.memory_space<vmem>>, vector<1x128xf32>
    %c0_17 = arith.constant 0 : index
    %c0_18 = arith.constant 0 : index
    %13 = vector.load %arg1[%c0_17, %c0_18] : memref<8x128xbf16, #tpu.memory_space<vmem>>, vector<8x128xbf16>
    %cst = arith.constant dense<0.000000e+00> : vector<8x128xf32>
    %14 = tpu.matmul %13, %1, %cst {dimension_numbers = #tpu.dot_dimension_numbers<[1], [0], [0], [1], [0, 0, 1, 1], [], []>} : vector<8x128xbf16>, vector<128x128xbf16>, vector<8x128xf32> -> vector<8x128xf32>
    %cst_19 = arith.constant 0.000000e+00 : f32
    %15 = vector.broadcast %cst_19 : f32 to vector<8x128xf32>
    %16 = arith.maximumf %14, %15 : vector<8x128xf32>
    %17 = arith.truncf %16 : vector<8x128xf32> to vector<8x128xbf16>
    %cst_20 = arith.constant dense<0.000000e+00> : vector<8x128xf32>
    %18 = tpu.matmul %17, %3, %cst_20 {dimension_numbers = #tpu.dot_dimension_numbers<[1], [0], [0], [1], [0, 0, 1, 1], [], []>} : vector<8x128xbf16>, vector<128x128xbf16>, vector<8x128xf32> -> vector<8x128xf32>
    %19 = vector.broadcast %8 : vector<1x128xf32> to vector<8x128xf32>
    %20 = arith.addf %18, %19 : vector<8x128xf32>
    %cst_21 = arith.constant 0.000000e+00 : f32
    %21 = vector.broadcast %cst_21 : f32 to vector<8x128xf32>
    %22 = arith.maximumf %20, %21 : vector<8x128xf32>
    %23 = arith.truncf %22 : vector<8x128xf32> to vector<8x128xbf16>
    %cst_22 = arith.constant dense<0.000000e+00> : vector<8x128xf32>
    %24 = tpu.matmul %23, %5, %cst_22 {dimension_numbers = #tpu.dot_dimension_numbers<[1], [0], [0], [1], [0, 0, 1, 1], [], []>} : vector<8x128xbf16>, vector<128x128xbf16>, vector<8x128xf32> -> vector<8x128xf32>
    %25 = vector.broadcast %9 : vector<1x128xf32> to vector<8x128xf32>
    %26 = arith.addf %24, %25 : vector<8x128xf32>
    %cst_23 = arith.constant 0.000000e+00 : f32
    %27 = vector.broadcast %cst_23 : f32 to vector<8x128xf32>
    %28 = arith.maximumf %26, %27 : vector<8x128xf32>
    %29 = arith.truncf %28 : vector<8x128xf32> to vector<8x128xbf16>
    %cst_24 = arith.constant dense<0.000000e+00> : vector<8x128xf32>
    %30 = tpu.matmul %29, %7, %cst_24 {dimension_numbers = #tpu.dot_dimension_numbers<[1], [0], [0], [1], [0, 0, 1, 1], [], []>} : vector<8x128xbf16>, vector<128x128xbf16>, vector<8x128xf32> -> vector<8x128xf32>
    %31 = vector.broadcast %10 : vector<1x128xf32> to vector<8x128xf32>
    %32 = arith.addf %30, %31 : vector<8x128xf32>
    %33 = vector.broadcast %11 : vector<1x128xf32> to vector<8x128xf32>
    %34 = arith.addf %32, %33 : vector<8x128xf32>
    %cst_25 = arith.constant dense<0xFF800000> : vector<8xf32>
    %35 = vector.multi_reduction <maximumf>, %34, %cst_25 [1] : vector<8x128xf32> to vector<8xf32>
    %36 = vector.shape_cast %35 : vector<8xf32> to vector<8x1xf32>
    %37 = vector.broadcast %36 : vector<8x1xf32> to vector<8x128xf32>
    %38 = arith.subf %34, %37 : vector<8x128xf32>
    %39 = math.exp %38 : vector<8x128xf32>
    %cst_26 = arith.constant dense<0.000000e+00> : vector<8xf32>
    %40 = vector.multi_reduction <add>, %39, %cst_26 [1] : vector<8x128xf32> to vector<8xf32>
    %41 = vector.shape_cast %40 : vector<8xf32> to vector<8x1xf32>
    %42 = tpu.reciprocal %41 {approx = true} : vector<8x1xf32> -> vector<8x1xf32>
    %43 = vector.broadcast %42 : vector<8x1xf32> to vector<8x128xf32>
    %44 = arith.mulf %39, %43 : vector<8x128xf32>
    %cst_27 = arith.constant 1.000000e+00 : f32
    %45 = vector.broadcast %cst_27 : f32 to vector<1x128xf32>
    %46 = arith.subf %45, %12 : vector<1x128xf32>
    %47 = vector.broadcast %46 : vector<1x128xf32> to vector<8x128xf32>
    %48 = arith.mulf %32, %47 : vector<8x128xf32>
    %49 = vector.broadcast %12 : vector<1x128xf32> to vector<8x128xf32>
    %50 = arith.mulf %44, %49 : vector<8x128xf32>
    %51 = arith.addf %48, %50 : vector<8x128xf32>
    %c0_28 = arith.constant 0 : index
    %c0_29 = arith.constant 0 : index
    %52 = vector.load %arg4[%c0_28, %c0_29] : memref<8x128xf32, #tpu.memory_space<vmem>>, vector<8x128xf32>
    tpu.vector_store %arg4[%c0_28, %c0_29], %51 {strides = array<i32>} : memref<8x128xf32, #tpu.memory_space<vmem>>, vector<8x128xf32>,
    return
  }
  func.func @transform_0(%arg0: i32) -> (i32, i32) {
    %c0_i32 = arith.constant 0 : i32
    %c0_i32_0 = arith.constant 0 : i32
    return %arg0, %c0_i32 : i32, i32
  }
  func.func @transform_1(%arg0: i32) -> (i32, i32, i32) {
    %c0_i32 = arith.constant 0 : i32
    %c0_i32_0 = arith.constant 0 : i32
    %c0_i32_1 = arith.constant 0 : i32
    %c0_i32_2 = arith.constant 0 : i32
    return %c0_i32, %c0_i32_0, %c0_i32_1 : i32, i32, i32
  }
  func.func @transform_2(%arg0: i32) -> (i32, i32) {
    %c0_i32 = arith.constant 0 : i32
    %c0_i32_0 = arith.constant 0 : i32
    %c0_i32_1 = arith.constant 0 : i32
    return %c0_i32, %c0_i32_0 : i32, i32
  }
  func.func @transform_3(%arg0: i32) -> (i32, i32) {
    %c0_i32 = arith.constant 0 : i32
    %c0_i32_0 = arith.constant 0 : i32
    return %arg0, %c0_i32 : i32, i32
  }
}

</mosaic_0001>

<llo_original>
// kernel: ltr_policy_forward.1
$region0: #{ltr_policy_forward.1}
  #allocation0 [shape = 'u32[]', space=smem, size = 0x4, offset = 0x4, fixed_abs, tag = 'smem constant byte address 0x4 - core index']
  #allocation1 [shape = 'u32[144,128]{1,0:T(1,128)}', space=vmem, size = 0x12000, scoped, tag = 'internal scratch']
  %s0 = inlined_call_operand.vmem [shape: bf16[8,128], index: 0, kind: input, shape index: {}]
  %s1 = inlined_call_operand.hbm [shape: bf16[4,128,128], index: 1, kind: input, shape index: {}]
  %s2 = inlined_call_operand.vmem [shape: f32[5,128], index: 2, kind: input, shape index: {}]
  %s3 = inlined_call_operand.vmem [shape: f32[8,128], index: 3, kind: output, shape index: {}]
  %s4 = sld [smem:[#allocation0]]
  $region26: #{ltr_policy_forward.1} parent=0
    _
  %s6 = ssub.s32 1, %s4
  %s7 = scalar_select 0, %s6, %s4
  $region1: #{ltr_policy_forward.1} parent=0
    #allocation2 [shape = 'u8[131072]{0}', space=vmem, size = 0x20000, scoped, tag = 'input window, operand 1, single buffered']
    #allocation3 [shape = 's32[1]{0}', space=sflag, size = 0x4, scoped, tag = 'scoped memory for ltr_policy_forward.1']
    %8 = vsyncpa [#allocation3], 0
    // Predicated region
    $region2: #{ltr_policy_forward.1} parent=1 // pred_check
      _
    $region3: #{ltr_policy_forward.1} parent=1 // pred_check_branch
      %10 = sbr.rel (0) target = $region5
    $region4: #{ltr_policy_forward.1} parent=1 // pred_region
      _
    $region5: #{ltr_policy_forward.1} parent=1 // pred_fallthru
      _
    // Predicated region
    $region6: #{ltr_policy_forward.1} parent=1 // pred_check
      _
    $region7: #{ltr_policy_forward.1} parent=1 // pred_check_branch
      %12 = sbr.rel (0) target = $region9
    $region8: #{ltr_policy_forward.1} parent=1 // pred_region
      %s14 = ssub.s32 4096, 4096
      %15 = vsyncadd [#allocation3], %s14
      %s16 = sshll.u32 [#allocation2], 4
      %s17 = int_to_ptr.vmem [resolvable:$true] %s16
      %22 = dma.hbm_to_vmem [thread:$0]  %s1, 4096, %s17, [#allocation3], 64, 64, 4
    $region9: #{ltr_policy_forward.1} parent=1 // pred_fallthru
      _
    // Predicated region
    $region10: #{ltr_policy_forward.1} parent=1 // pred_check
      _
    $region11: #{ltr_policy_forward.1} parent=1 // pred_check_branch
      %24 = sbr.rel (0) target = $region13
    $region12: #{ltr_policy_forward.1} parent=1 // pred_region
      _
    $region13: #{ltr_policy_forward.1} parent=1 // pred_fallthru
      _
    // Predicated region
    $region14: #{ltr_policy_forward.1} parent=1 // pred_check
      _
    $region15: #{ltr_policy_forward.1} parent=1 // pred_check_branch
      %26 = sbr.rel (0) target = $region17
    $region16: #{ltr_policy_forward.1} parent=1 // pred_region
      %27 = dma.done [#allocation3], 4096
    $region17: #{ltr_policy_forward.1} parent=1 // pred_fallthru
      _
    %v29 = vld [vmem:[#allocation2] sm:$0xf]
    %v30 = vld [vmem:[#allocation2 + $0x4] sm:$0xf]
    %v31 = vld [vmem:[#allocation2 + $0x8] sm:$0xf]
    %v32 = vld [vmem:[#allocation2 + $0xc] sm:$0xf]
    %v33 = vld [vmem:[#allocation2 + $0x10] sm:$0xf]
    %v34 = vld [vmem:[#allocation2 + $0x14] sm:$0xf]
    %v35 = vld [vmem:[#allocation2 + $0x18] sm:$0xf]
    %v36 = vld [vmem:[#allocation2 + $0x1c] sm:$0xf]
    %v37 = vld [vmem:[#allocation2 + $0x20] sm:$0xf]
    %v38 = vld [vmem:[#allocation2 + $0x24] sm:$0xf]
    %v39 = vld [vmem:[#allocation2 + $0x28] sm:$0xf]
    %v40 = vld [vmem:[#allocation2 + $0x2c] sm:$0xf]
    %v41 = vld [vmem:[#allocation2 + $0x30] sm:$0xf]
    %v42 = vld [vmem:[#allocation2 + $0x34] sm:$0xf]
    %v43 = vld [vmem:[#allocation2 + $0x38] sm:$0xf]
    %v44 = vld [vmem:[#allocation2 + $0x3c] sm:$0xf]
    %s45 = scalar_lea.vmem [#allocation2], 64
    %v46 = vld [vmem:[%s45] sm:$0xf]
    %v47 = vld [vmem:[%s45 + $0x4] sm:$0xf]
    %v48 = vld [vmem:[%s45 + $0x8] sm:$0xf]
    %v49 = vld [vmem:[%s45 + $0xc] sm:$0xf]
    %v50 = vld [vmem:[%s45 + $0x10] sm:$0xf]
    %v51 = vld [vmem:[%s45 + $0x14] sm:$0xf]
    %v52 = vld [vmem:[%s45 + $0x18] sm:$0xf]
    %v53 = vld [vmem:[%s45 + $0x1c] sm:$0xf]
    %v54 = vld [vmem:[%s45 + $0x20] sm:$0xf]
    %v55 = vld [vmem:[%s45 + $0x24] sm:$0xf]
    %v56 = vld [vmem:[%s45 + $0x28] sm:$0xf]
    %v57 = vld [vmem:[%s45 + $0x2c] sm:$0xf]
    %v58 = vld [vmem:[%s45 + $0x30] sm:$0xf]
    %v59 = vld [vmem:[%s45 + $0x34] sm:$0xf]
    %v60 = vld [vmem:[%s45 + $0x38] sm:$0xf]
    %v61 = vld [vmem:[%s45 + $0x3c] sm:$0xf]
    %s62 = scalar_lea.vmem [#allocation2], 128
    %v63 = vld [vmem:[%s62] sm:$0xf]
    %v64 = vld [vmem:[%s62 + $0x4] sm:$0xf]
    %v65 = vld [vmem:[%s62 + $0x8] sm:$0xf]
    %v66 = vld [vmem:[%s62 + $0xc] sm:$0xf]
    %v67 = vld [vmem:[%s62 + $0x10] sm:$0xf]
    %v68 = vld [vmem:[%s62 + $0x14] sm:$0xf]
    %v69 = vld [vmem:[%s62 + $0x18] sm:$0xf]
    %v70 = vld [vmem:[%s62 + $0x1c] sm:$0xf]
    %v71 = vld [vmem:[%s62 + $0x20] sm:$0xf]
    %v72 = vld [vmem:[%s62 + $0x24] sm:$0xf]
    %v73 = vld [vmem:[%s62 + $0x28] sm:$0xf]
    %v74 = vld [vmem:[%s62 + $0x2c] sm:$0xf]
    %v75 = vld [vmem:[%s62 + $0x30] sm:$0xf]
    %v76 = vld [vmem:[%s62 + $0x34] sm:$0xf]
    %v77 = vld [vmem:[%s62 + $0x38] sm:$0xf]
    %v78 = vld [vmem:[%s62 + $0x3c] sm:$0xf]
    %s79 = scalar_lea.vmem [#allocation2], 192
    %v80 = vld [vmem:[%s79] sm:$0xf]
    %v81 = vld [vmem:[%s79 + $0x4] sm:$0xf]
    %v82 = vld [vmem:[%s79 + $0x8] sm:$0xf]
    %v83 = vld [vmem:[%s79 + $0xc] sm:$0xf]
    %v84 = vld [vmem:[%s79 + $0x10] sm:$0xf]
    %v85 = vld [vmem:[%s79 + $0x14] sm:$0xf]
    %v86 = vld [vmem:[%s79 + $0x18] sm:$0xf]
    %v87 = vld [vmem:[%s79 + $0x1c] sm:$0xf]
    %v88 = vld [vmem:[%s79 + $0x20] sm:$0xf]
    %v89 = vld [vmem:[%s79 + $0x24] sm:$0xf]
    %v90 = vld [vmem:[%s79 + $0x28] sm:$0xf]
    %v91 = vld [vmem:[%s79 + $0x2c] sm:$0xf]
    %v92 = vld [vmem:[%s79 + $0x30] sm:$0xf]
    %v93 = vld [vmem:[%s79 + $0x34] sm:$0xf]
    %v94 = vld [vmem:[%s79 + $0x38] sm:$0xf]
    %v95 = vld [vmem:[%s79 + $0x3c] sm:$0xf]
    %v96 = vld [vmem:[%s2] sm:$0x1]
    %v97 = vld [vmem:[%s2 + $0x1] sm:$0x1]
    %v98 = vld [vmem:[%s2 + $0x2] sm:$0x1]
    %v99 = vld [vmem:[%s2 + $0x3] sm:$0x1]
    %v100 = vld [vmem:[%s2 + $0x4] sm:$0x1]
    %v101 = vld [vmem:[%s0] sm:$0xf]
    %v118 = vunpack.c.l.b16 %v29
    %v119 = vunpack.c.l.b16 %v30
    %v120 = vunpack.c.l.b16 %v31
    %v121 = vunpack.c.l.b16 %v32
    %v122 = vunpack.c.l.b16 %v33
    %v123 = vunpack.c.l.b16 %v34
    %v124 = vunpack.c.l.b16 %v35
    %v125 = vunpack.c.l.b16 %v36
    %v126 = vunpack.c.l.b16 %v37
    %v127 = vunpack.c.l.b16 %v38
    %v128 = vunpack.c.l.b16 %v39
    %v129 = vunpack.c.l.b16 %v40
    %v130 = vunpack.c.l.b16 %v41
    %v131 = vunpack.c.l.b16 %v42
    %v132 = vunpack.c.l.b16 %v43
    %v133 = vunpack.c.l.b16 %v44
    %v134 = vpack.c.b16 %v119, %v118
    %v135 = vpack.c.b16 %v121, %v120
    %v136 = vpack.c.b16 %v123, %v122
    %v137 = vpack.c.b16 %v125, %v124
    %v138 = vpack.c.b16 %v127, %v126
    %v139 = vpack.c.b16 %v129, %v128
    %v140 = vpack.c.b16 %v131, %v130
    %v141 = vpack.c.b16 %v133, %v132
    %150 = vmatprep.subr.bf16.mxu0 0
    %151 = vmatpush1.bf16.msra.mxu0 %v141
    %152 = vmatprep.subr.bf16.mxu0 0
    %153 = vmatpush1.bf16.msra.mxu0 %v140
    %154 = vmatprep.subr.bf16.mxu0 0
    %155 = vmatpush1.bf16.msra.mxu0 %v139
    %156 = vmatprep.subr.bf16.mxu0 0
    %157 = vmatpush1.bf16.msra.mxu0 %v138
    %158 = vmatprep.subr.bf16.mxu0 0
    %159 = vmatpush1.bf16.msra.mxu0 %v137
    %160 = vmatprep.subr.bf16.mxu0 0
    %161 = vmatpush1.bf16.msra.mxu0 %v136
    %162 = vmatprep.subr.bf16.mxu0 0
    %163 = vmatpush1.bf16.msra.mxu0 %v135
    %164 = vmatprep.subr.bf16.mxu0 0
    %165 = vmatpush1.bf16.msra.mxu0 %v134
    %166 = vmatprep.subr.bf16.mxu0 0
    %167 = vmatpush2.bf16.msra.mxu0 0
    %168 = vmatprep.subr.bf16.mxu0 0
    %169 = vmatpush2.bf16.msra.mxu0 0
    %170 = vmatprep.subr.bf16.mxu0 0
    %171 = vmatpush2.bf16.msra.mxu0 0
    %172 = vmatprep.subr.bf16.mxu0 0
    %173 = vmatpush2.bf16.msra.mxu0 0
    %174 = vmatprep.subr.bf16.mxu0 0
    %175 = vmatpush2.bf16.msra.mxu0 0
    %176 = vmatprep.subr.bf16.mxu0 0
    %177 = vmatpush2.bf16.msra.mxu0 0
    %178 = vmatprep.subr.bf16.mxu0 0
    %179 = vmatpush2.bf16.msra.mxu0 0
    %180 = vmatprep.subr.bf16.mxu0 0
    %181 = vmatpush2.bf16.msra.mxu0 0
    %182 = vmatprep.mubr.bf16.mxu0 0
    %183 = vmatmul.mubr.bf16.gmra.mxu0 %v101
    %v184 = vpop.f32.mrf.mxu0
    %v185 = vadd.f32 0.0, %v184
    %v186 = vpop.f32.mrf.mxu0
    %v187 = vpop.f32.mrf.mxu0
    %v188 = vpop.f32.mrf.mxu0
    %189 = vdwg.mxu0
    %v190 = vmax.f32 %v185, 0.0
    %v191 = vpack.c.bf16 %v190, %v190
    %v192 = vlaneseq
    %v193 = vshrl.u32 %v192, 7
    %v194 = vsub.s32 0, %v193
    %v195 = vrot.slane %v96, %v194
    %v212 = vunpack.c.l.b16 %v46
    %v213 = vunpack.c.l.b16 %v47
    %v214 = vunpack.c.l.b16 %v48
    %v215 = vunpack.c.l.b16 %v49
    %v216 = vunpack.c.l.b16 %v50
    %v217 = vunpack.c.l.b16 %v51
    %v218 = vunpack.c.l.b16 %v52
    %v219 = vunpack.c.l.b16 %v53
    %v220 = vunpack.c.l.b16 %v54
    %v221 = vunpack.c.l.b16 %v55
    %v222 = vunpack.c.l.b16 %v56
    %v223 = vunpack.c.l.b16 %v57
    %v224 = vunpack.c.l.b16 %v58
    %v225 = vunpack.c.l.b16 %v59
    %v226 = vunpack.c.l.b16 %v60
    %v227 = vunpack.c.l.b16 %v61
    %v228 = vpack.c.b16 %v213, %v212
    %v229 = vpack.c.b16 %v215, %v214
    %v230 = vpack.c.b16 %v217, %v216
    %v231 = vpack.c.b16 %v219, %v218
    %v232 = vpack.c.b16 %v221, %v220
    %v233 = vpack.c.b16 %v223, %v222
    %v234 = vpack.c.b16 %v225, %v224
    %v235 = vpack.c.b16 %v227, %v226
    %244 = vmatprep.subr.bf16.mxu0 0
    %245 = vmatpush1.bf16.msra.mxu0 %v235
    %246 = vmatprep.subr.bf16.mxu0 0
    %247 = vmatpush1.bf16.msra.mxu0 %v234
    %248 = vmatprep.subr.bf16.mxu0 0
    %249 = vmatpush1.bf16.msra.mxu0 %v233
    %250 = vmatprep.subr.bf16.mxu0 0
    %251 = vmatpush1.bf16.msra.mxu0 %v232
    %252 = vmatprep.subr.bf16.mxu0 0
    %253 = vmatpush1.bf16.msra.mxu0 %v231
    %254 = vmatprep.subr.bf16.mxu0 0
    %255 = vmatpush1.bf16.msra.mxu0 %v230
    %256 = vmatprep.subr.bf16.mxu0 0
    %257 = vmatpush1.bf16.msra.mxu0 %v229
    %258 = vmatprep.subr.bf16.mxu0 0
    %259 = vmatpush1.bf16.msra.mxu0 %v228
    %260 = vmatprep.subr.bf16.mxu0 0
    %261 = vmatpush2.bf16.msra.mxu0 0
    %262 = vmatprep.subr.bf16.mxu0 0
    %263 = vmatpush2.bf16.msra.mxu0 0
    %264 = vmatprep.subr.bf16.mxu0 0
    %265 = vmatpush2.bf16.msra.mxu0 0
    %266 = vmatprep.subr.bf16.mxu0 0
    %267 = vmatpush2.bf16.msra.mxu0 0
    %268 = vmatprep.subr.bf16.mxu0 0
    %269 = vmatpush2.bf16.msra.mxu0 0
    %270 = vmatprep.subr.bf16.mxu0 0
    %271 = vmatpush2.bf16.msra.mxu0 0
    %272 = vmatprep.subr.bf16.mxu0 0
    %273 = vmatpush2.bf16.msra.mxu0 0
    %274 = vmatprep.subr.bf16.mxu0 0
    %275 = vmatpush2.bf16.msra.mxu0 0
    %276 = vmatprep.mubr.bf16.mxu0 0
    %277 = vmatmul.mubr.bf16.gmra.mxu0 %v191
    %v278 = vpop.f32.mrf.mxu0
    %v279 = vadd.f32 %v195, %v278
    %v280 = vpop.f32.mrf.mxu0
    %v281 = vpop.f32.mrf.mxu0
    %v282 = vpop.f32.mrf.mxu0
    %283 = vdwg.mxu0
    %v284 = vmax.f32 %v279, 0.0
    %v285 = vpack.c.bf16 %v284, %v284
    %v286 = vlaneseq
    %v287 = vshrl.u32 %v286, 7
    %v288 = vsub.s32 0, %v287
    %v289 = vrot.slane %v97, %v288
    %v306 = vunpack.c.l.b16 %v63
    %v307 = vunpack.c.l.b16 %v64
    %v308 = vunpack.c.l.b16 %v65
    %v309 = vunpack.c.l.b16 %v66
    %v310 = vunpack.c.l.b16 %v67
    %v311 = vunpack.c.l.b16 %v68
    %v312 = vunpack.c.l.b16 %v69
    %v313 = vunpack.c.l.b16 %v70
    %v314 = vunpack.c.l.b16 %v71
    %v315 = vunpack.c.l.b16 %v72
    %v316 = vunpack.c.l.b16 %v73
    %v317 = vunpack.c.l.b16 %v74
    %v318 = vunpack.c.l.b16 %v75
    %v319 = vunpack.c.l.b16 %v76
    %v320 = vunpack.c.l.b16 %v77
    %v321 = vunpack.c.l.b16 %v78
    %v322 = vpack.c.b16 %v307, %v306
    %v323 = vpack.c.b16 %v309, %v308
    %v324 = vpack.c.b16 %v311, %v310
    %v325 = vpack.c.b16 %v313, %v312
    %v326 = vpack.c.b16 %v315, %v314
    %v327 = vpack.c.b16 %v317, %v316
    %v328 = vpack.c.b16 %v319, %v318
    %v329 = vpack.c.b16 %v321, %v320
    %338 = vmatprep.subr.bf16.mxu0 0
    %339 = vmatpush1.bf16.msra.mxu0 %v329
    %340 = vmatprep.subr.bf16.mxu0 0
    %341 = vmatpush1.bf16.msra.mxu0 %v328
    %342 = vmatprep.subr.bf16.mxu0 0
    %343 = vmatpush1.bf16.msra.mxu0 %v327
    %344 = vmatprep.subr.bf16.mxu0 0
    %345 = vmatpush1.bf16.msra.mxu0 %v326
    %346 = vmatprep.subr.bf16.mxu0 0
    %347 = vmatpush1.bf16.msra.mxu0 %v325
    %348 = vmatprep.subr.bf16.mxu0 0
    %349 = vmatpush1.bf16.msra.mxu0 %v324
    %350 = vmatprep.subr.bf16.mxu0 0
    %351 = vmatpush1.bf16.msra.mxu0 %v323
    %352 = vmatprep.subr.bf16.mxu0 0
    %353 = vmatpush1.bf16.msra.mxu0 %v322
    %354 = vmatprep.subr.bf16.mxu0 0
    %355 = vmatpush2.bf16.msra.mxu0 0
    %356 = vmatprep.subr.bf16.mxu0 0
    %357 = vmatpush2.bf16.msra.mxu0 0
    %358 = vmatprep.subr.bf16.mxu0 0
    %359 = vmatpush2.bf16.msra.mxu0 0
    %360 = vmatprep.subr.bf16.mxu0 0
    %361 = vmatpush2.bf16.msra.mxu0 0
    %362 = vmatprep.subr.bf16.mxu0 0
    %363 = vmatpush2.bf16.msra.mxu0 0
    %364 = vmatprep.subr.bf16.mxu0 0
    %365 = vmatpush2.bf16.msra.mxu0 0
    %366 = vmatprep.subr.bf16.mxu0 0
    %367 = vmatpush2.bf16.msra.mxu0 0
    %368 = vmatprep.subr.bf16.mxu0 0
    %369 = vmatpush2.bf16.msra.mxu0 0
    %370 = vmatprep.mubr.bf16.mxu0 0
    %371 = vmatmul.mubr.bf16.gmra.mxu0 %v285
    %v372 = vpop.f32.mrf.mxu0
    %v373 = vadd.f32 %v289, %v372
    %v374 = vpop.f32.mrf.mxu0
    %v375 = vpop.f32.mrf.mxu0
    %v376 = vpop.f32.mrf.mxu0
    %377 = vdwg.mxu0
    %v378 = vmax.f32 %v373, 0.0
    %v379 = vpack.c.bf16 %v378, %v378
    %v380 = vlaneseq
    %v381 = vshrl.u32 %v380, 7
    %v382 = vsub.s32 0, %v381
    %v383 = vrot.slane %v98, %v382
    %v400 = vunpack.c.l.b16 %v80
    %v401 = vunpack.c.l.b16 %v81
    %v402 = vunpack.c.l.b16 %v82
    %v403 = vunpack.c.l.b16 %v83
    %v404 = vunpack.c.l.b16 %v84
    %v405 = vunpack.c.l.b16 %v85
    %v406 = vunpack.c.l.b16 %v86
    %v407 = vunpack.c.l.b16 %v87
    %v408 = vunpack.c.l.b16 %v88
    %v409 = vunpack.c.l.b16 %v89
    %v410 = vunpack.c.l.b16 %v90
    %v411 = vunpack.c.l.b16 %v91
    %v412 = vunpack.c.l.b16 %v92
    %v413 = vunpack.c.l.b16 %v93
    %v414 = vunpack.c.l.b16 %v94
    %v415 = vunpack.c.l.b16 %v95
    %v416 = vpack.c.b16 %v401, %v400
    %v417 = vpack.c.b16 %v403, %v402
    %v418 = vpack.c.b16 %v405, %v404
    %v419 = vpack.c.b16 %v407, %v406
    %v420 = vpack.c.b16 %v409, %v408
    %v421 = vpack.c.b16 %v411, %v410
    %v422 = vpack.c.b16 %v413, %v412
    %v423 = vpack.c.b16 %v415, %v414
    %432 = vmatprep.subr.bf16.mxu0 0
    %433 = vmatpush1.bf16.msra.mxu0 %v423
    %434 = vmatprep.subr.bf16.mxu0 0
    %435 = vmatpush1.bf16.msra.mxu0 %v422
    %436 = vmatprep.subr.bf16.mxu0 0
    %437 = vmatpush1.bf16.msra.mxu0 %v421
    %438 = vmatprep.subr.bf16.mxu0 0
    %439 = vmatpush1.bf16.msra.mxu0 %v420
    %440 = vmatprep.subr.bf16.mxu0 0
    %441 = vmatpush1.bf16.msra.mxu0 %v419
    %442 = vmatprep.subr.bf16.mxu0 0
    %443 = vmatpush1.bf16.msra.mxu0 %v418
    %444 = vmatprep.subr.bf16.mxu0 0
    %445 = vmatpush1.bf16.msra.mxu0 %v417
    %446 = vmatprep.subr.bf16.mxu0 0
    %447 = vmatpush1.bf16.msra.mxu0 %v416
    %448 = vmatprep.subr.bf16.mxu0 0
    %449 = vmatpush2.bf16.msra.mxu0 0
    %450 = vmatprep.subr.bf16.mxu0 0
    %451 = vmatpush2.bf16.msra.mxu0 0
    %452 = vmatprep.subr.bf16.mxu0 0
    %453 = vmatpush2.bf16.msra.mxu0 0
    %454 = vmatprep.subr.bf16.mxu0 0
    %455 = vmatpush2.bf16.msra.mxu0 0
    %456 = vmatprep.subr.bf16.mxu0 0
    %457 = vmatpush2.bf16.msra.mxu0 0
    %458 = vmatprep.subr.bf16.mxu0 0
    %459 = vmatpush2.bf16.msra.mxu0 0
    %460 = vmatprep.subr.bf16.mxu0 0
    %461 = vmatpush2.bf16.msra.mxu0 0
    %462 = vmatprep.subr.bf16.mxu0 0
    %463 = vmatpush2.bf16.msra.mxu0 0
    %464 = vmatprep.mubr.bf16.mxu0 0
    %465 = vmatmul.mubr.bf16.gmra.mxu0 %v379
    %v466 = vpop.f32.mrf.mxu0
    %v467 = vadd.f32 %v383, %v466
    %v468 = vpop.f32.mrf.mxu0
    %v469 = vpop.f32.mrf.mxu0
    %v470 = vpop.f32.mrf.mxu0
    %471 = vdwg.mxu0
    %v472 = vlaneseq
    %v473 = vshrl.u32 %v472, 7
    %v474 = vsub.s32 0, %v473
    %v475 = vrot.slane %v99, %v474
    %v476 = vadd.f32 %v467, %v475
    %477 = vmax.xlane.f32.xlu0 %v476
    %v478 = vpop.xlane.xlu0 %477
    %v479 = vsub.f32 %v476, %v478
    %v480 = vmul.f32 %v479, 1.442695
    %v481 = vpow.pop %v480
    %482 = vadd.xlane.f32.xlu0 %v481
    %v483 = vpop.xlane.xlu0 %482
    %v484 = vrcp.pop %v483
    %v485 = vmul.f32 %v481, %v484
    %v486 = vsub.f32 1.0, %v100
    %v487 = vlaneseq
    %v488 = vshrl.u32 %v487, 7
    %v489 = vsub.s32 0, %v488
    %v490 = vrot.slane %v486, %v489
    %v491 = vmul.f32 %v467, %v490
    %v492 = vlaneseq
    %v493 = vshrl.u32 %v492, 7
    %v494 = vsub.s32 0, %v493
    %v495 = vrot.slane %v100, %v494
    %v496 = vmul.f32 %v485, %v495
    %v497 = vadd.f32 %v491, %v496
    %498 = vst [vmem:[%s3] sm:$0xff] %v497
    // Predicated region
    $region18: #{ltr_policy_forward.1} parent=1 // pred_check
      _
    $region19: #{ltr_policy_forward.1} parent=1 // pred_check_branch
      %500 = sbr.rel (0) target = $region21
    $region20: #{ltr_policy_forward.1} parent=1 // pred_region
      _
    $region21: #{ltr_policy_forward.1} parent=1 // pred_fallthru
      _
    // Predicated region
    $region22: #{ltr_policy_forward.1} parent=1 // pred_check
      _
    $region23: #{ltr_policy_forward.1} parent=1 // pred_check_branch
      %502 = sbr.rel (0) target = $region25
    $region24: #{ltr_policy_forward.1} parent=1 // pred_region
      _
    $region25: #{ltr_policy_forward.1} parent=1 // pred_fallthru
      _
    %503 = vsyncpa [#allocation3], 1

</llo_original>
